<compile_context>
chip_gen: v6e
topology: v6e:2x2x1
jax: 0.10.0
libtpu: 0.0.40
codegen_flags: <defaults>
</compile_context>

<pallas_src>
import functools

import jax
import jax.numpy as jnp
from jax import lax
from jax.experimental import pallas as pl
from jax.experimental.pallas import tpu as pltpu


def _ln2d_kernel(x_ref, w_ref, b_ref, o_ref, *, eps: float, fuse_gelu: bool):
    # x_ref/o_ref: (Nb, C, T) block — batch folded, spatial (lane-dense) last.
    # w_ref/b_ref: (C, 1) per-channel affine params.
    x = x_ref[...].astype(jnp.float32)                       # (Nb, C, T)
    w = w_ref[...].astype(jnp.float32)                       # (C, 1)
    b = b_ref[...].astype(jnp.float32)                       # (C, 1)

    inv_c = 1.0 / x.shape[1]
    u = jnp.sum(x, axis=1, keepdims=True) * inv_c            # (Nb, 1, T) mean over C
    d = x - u
    s = jnp.sum(d * d, axis=1, keepdims=True) * inv_c        # (Nb, 1, T) biased var
    rstd = lax.rsqrt(s + eps)                                # EUP, own VLIW slot

    y = (d * rstd) * w[None, :, :] + b[None, :, :]           # (Nb, C, T)
    if fuse_gelu:
        # tanh-approximate GELU; exp/tanh ride the otherwise-idle EUP slot.
        inner = 0.7978845608028654 * (y + 0.044715 * (y * y * y))
        y = 0.5 * y * (1.0 + jnp.tanh(inner))
    o_ref[...] = y.astype(o_ref.dtype)


def _choose_blocks(N: int, C: int, HW: int, itemsize: int,
                   max_block_bytes: int):
    """Pick (Nb, T): batch-fold factor and lane-dense spatial tile.

    Legality: T is either the full HW or a multiple of 128 that divides HW;
    Nb divides N.  Preference: biggest blocks under max_block_bytes, but keep
    >= 2 total grid steps when the data can be split (v7x has 2 TensorCores).
    """
    def spatial_tiles():
        # Legal T values, descending.
        yield HW
        t = (HW // 2) // 128 * 128
        while t >= 128:
            if HW % t == 0:
                yield t
            t -= 128

    # 1. Largest legal spatial tile under the budget (for a single batch item).
    T = HW
    for t in spatial_tiles():
        if C * t * itemsize <= max_block_bytes:
            T = t
            break

    # 2. Fold as many batch items as still fit.
    Nb = 1
    for nb in range(N, 0, -1):
        if N % nb == 0 and nb * C * T * itemsize <= max_block_bytes:
            Nb = nb
            break

    # 3. Keep at least two grid steps when splittable (v7x two-core sharding);
    #    on single-TC v5e/v6e the extra step costs <1 us.
    if (N // Nb) * (HW // T) == 1:
        if N >= 2:
            for nb in range(N // 2, 0, -1):
                if N % nb == 0:
                    Nb = nb
                    break
        else:
            for t in spatial_tiles():
                if t < HW:
                    T = t
                    break
    return Nb, T


def layernorm2d(x: jax.Array, weight: jax.Array, bias: jax.Array,
                eps: float = 1e-6, *, fuse_gelu: bool = False,
                max_block_bytes: int = 2 << 20) -> jax.Array:
    """x: (N, C, H, W); weight, bias: (C,).  Returns (N, C, H, W).

    Matches PyTorch LayerNorm2d exactly; fuse_gelu=True additionally applies a
    tanh-approximate GELU (the activation that follows each LayerNorm2d inside
    PromptEncoder.mask_downscaling) before the final store.
    """
    N, C, H, W = x.shape
    HW = H * W

    # Free reshapes: spatial axis (lane-dense) last, params as (C, 1).
    x2 = x.reshape(N, C, HW)
    w2 = weight.reshape(C, 1)
    b2 = bias.reshape(C, 1)

    Nb, T = _choose_blocks(N, C, HW, x.dtype.itemsize, max_block_bytes)
    grid = (N // Nb, HW // T)

    out = pl.pallas_call(
        functools.partial(_ln2d_kernel, eps=eps, fuse_gelu=fuse_gelu),
        out_shape=jax.ShapeDtypeStruct((N, C, HW), x.dtype),
        grid_spec=pl.GridSpec(
            grid=grid,
            in_specs=[
                pl.BlockSpec((Nb, C, T), lambda n, j: (n, 0, j)),
                pl.BlockSpec((C, 1), lambda n, j: (0, 0)),
                pl.BlockSpec((C, 1), lambda n, j: (0, 0)),
            ],
            out_specs=pl.BlockSpec((Nb, C, T), lambda n, j: (n, 0, j)),
        ),
        compiler_params=pltpu.CompilerParams(
            dimension_semantics=("parallel", "parallel"),
            vmem_limit_bytes=32 * 1024 * 1024),
    )(x2, w2, b2)

    return out.reshape(N, C, H, W)


if __name__ == "__main__":
    key = jax.random.PRNGKey(0)
    kx, kw, kb, kx2 = jax.random.split(key, 4)
    eps = 1e-6

    def reference_ln(x, w, b):
        # Mirrors the PyTorch LayerNorm2d forward exactly.
        u = jnp.mean(x, axis=1, keepdims=True)
        s = jnp.mean((x - u) ** 2, axis=1, keepdims=True)
        y = (x - u) / jnp.sqrt(s + eps)
        return w[None, :, None, None] * y + b[None, :, None, None]

    # Case A: mask_downscaling's first LayerNorm2d at small test shapes.
    N, C, H, W = 2, 4, 16, 16
    x = jax.random.normal(kx, (N, C, H, W), dtype=jnp.float32)
    weight = jnp.ones((C,), jnp.float32) + 0.1 * jax.random.normal(kw, (C,), jnp.float32)
    bias = 0.1 * jax.random.normal(kb, (C,), jnp.float32)

    out = jax.block_until_ready(layernorm2d(x, weight, bias, eps))
    ref = reference_ln(x, weight, bias)
    assert out.shape == (N, C, H, W)
    assert jnp.allclose(out, ref, atol=1e-5, rtol=1e-5), "LN mismatch vs reference"

    # Fused LN + GELU (the activation that follows LayerNorm2d in mask_downscaling).
    out_g = jax.block_until_ready(layernorm2d(x, weight, bias, eps, fuse_gelu=True))
    ref_g = jax.nn.gelu(ref, approximate=True)
    assert jnp.allclose(out_g, ref_g, atol=1e-5, rtol=1e-5), "LN+GELU mismatch vs reference"

    # Case B: exercises the multi-step spatial grid (N=1 splits HW into 2 tiles).
    N2, C2, H2, W2 = 1, 4, 32, 32
    xb = jax.random.normal(kx2, (N2, C2, H2, W2), dtype=jnp.float32)
    wb = jnp.ones((C2,), jnp.float32)
    bb = jnp.zeros((C2,), jnp.float32)
    out2 = jax.block_until_ready(layernorm2d(xb, wb, bb, eps))
    ref2 = reference_ln(xb, wb, bb)
    assert jnp.allclose(out2, ref2, atol=1e-5, rtol=1e-5), "multi-tile LN mismatch"

    print("KERNEL_OK")
</pallas_src>

<mosaic_0001>
module attributes {stable_mosaic.version = 11 : i64} {
  func.func @_ln2d_kernel(%arg0: i32, %arg1: i32, %arg2: memref<1x4x256xf32, #tpu.memory_space<vmem>>, %arg3: memref<4x1xf32, #tpu.memory_space<vmem>>, %arg4: memref<4x1xf32, #tpu.memory_space<vmem>>, %arg5: memref<1x4x256xf32, #tpu.memory_space<vmem>>) attributes {dimension_semantics = [#tpu.dimension_semantics<parallel>, #tpu.dimension_semantics<parallel>], iteration_bounds = array<i64: 2, 1>, scalar_prefetch = 0 : i64, scratch_operands = 0 : i64, tpu.core_type = #tpu.core_type<tc>, window_params = [{transform_indices = @transform_0, window_bounds = array<i64: 1, 4, 256>}, {pipeline_mode = #tpu.pipeline_mode<synchronous>, transform_indices = @transform_1, window_bounds = array<i64: 4, 1>}, {pipeline_mode = #tpu.pipeline_mode<synchronous>, transform_indices = @transform_2, window_bounds = array<i64: 4, 1>}, {transform_indices = @transform_3, window_bounds = array<i64: 1, 4, 256>}]} {
    %c0 = arith.constant 0 : index
    %c0_0 = arith.constant 0 : index
    %c0_1 = arith.constant 0 : index
    %0 = vector.load %arg2[%c0, %c0_0, %c0_1] : memref<1x4x256xf32, #tpu.memory_space<vmem>>, vector<1x4x256xf32>
    %c0_2 = arith.constant 0 : index
    %c0_3 = arith.constant 0 : index
    %1 = vector.load %arg3[%c0_2, %c0_3] : memref<4x1xf32, #tpu.memory_space<vmem>>, vector<4x1xf32>
    %c0_4 = arith.constant 0 : index
    %c0_5 = arith.constant 0 : index
    %2 = vector.load %arg4[%c0_4, %c0_5] : memref<4x1xf32, #tpu.memory_space<vmem>>, vector<4x1xf32>
    %cst = arith.constant dense<0.000000e+00> : vector<1x256xf32>
    %3 = vector.multi_reduction <add>, %0, %cst [1] : vector<1x4x256xf32> to vector<1x256xf32>
    %4 = vector.shape_cast %3 : vector<1x256xf32> to vector<1x1x256xf32>
    %cst_6 = arith.constant 2.500000e-01 : f32
    %5 = vector.broadcast %cst_6 : f32 to vector<1x1x256xf32>
    %6 = arith.mulf %4, %5 : vector<1x1x256xf32>
    %7 = vector.broadcast %6 : vector<1x1x256xf32> to vector<1x4x256xf32>
    %8 = arith.subf %0, %7 : vector<1x4x256xf32>
    %9 = arith.mulf %8, %8 : vector<1x4x256xf32>
    %cst_7 = arith.constant dense<0.000000e+00> : vector<1x256xf32>
    %10 = vector.multi_reduction <add>, %9, %cst_7 [1] : vector<1x4x256xf32> to vector<1x256xf32>
    %11 = vector.shape_cast %10 : vector<1x256xf32> to vector<1x1x256xf32>
    %cst_8 = arith.constant 2.500000e-01 : f32
    %12 = vector.broadcast %cst_8 : f32 to vector<1x1x256xf32>
    %13 = arith.mulf %11, %12 : vector<1x1x256xf32>
    %cst_9 = arith.constant 9.99999997E-7 : f32
    %14 = vector.broadcast %cst_9 : f32 to vector<1x1x256xf32>
    %15 = arith.addf %13, %14 : vector<1x1x256xf32>
    %16 = math.rsqrt %15 : vector<1x1x256xf32>
    %17 = vector.broadcast %16 : vector<1x1x256xf32> to vector<1x4x256xf32>
    %18 = arith.mulf %8, %17 : vector<1x4x256xf32>
    %19 = vector.shape_cast %1 : vector<4x1xf32> to vector<1x4x1xf32>
    %20 = vector.broadcast %19 : vector<1x4x1xf32> to vector<1x4x256xf32>
    %21 = arith.mulf %18, %20 : vector<1x4x256xf32>
    %22 = vector.shape_cast %2 : vector<4x1xf32> to vector<1x4x1xf32>
    %23 = vector.broadcast %22 : vector<1x4x1xf32> to vector<1x4x256xf32>
    %24 = arith.addf %21, %23 : vector<1x4x256xf32>
    %c0_10 = arith.constant 0 : index
    %c0_11 = arith.constant 0 : index
    %c0_12 = arith.constant 0 : index
    %25 = vector.load %arg5[%c0_10, %c0_11, %c0_12] : memref<1x4x256xf32, #tpu.memory_space<vmem>>, vector<1x4x256xf32>
    tpu.vector_store %arg5[%c0_10, %c0_11, %c0_12], %24 {strides = array<i32>} : memref<1x4x256xf32, #tpu.memory_space<vmem>>, vector<1x4x256xf32>,
    return
  }
  func.func @transform_0(%arg0: i32, %arg1: i32) -> (i32, i32, i32) {
    %c0_i32 = arith.constant 0 : i32
    %c0_i32_0 = arith.constant 0 : i32
    return %arg0, %c0_i32, %arg1 : i32, i32, i32
  }
  func.func @transform_1(%arg0: i32, %arg1: i32) -> (i32, i32) {
    %c0_i32 = arith.constant 0 : i32
    %c0_i32_0 = arith.constant 0 : i32
    %c0_i32_1 = arith.constant 0 : i32
    return %c0_i32, %c0_i32_0 : i32, i32
  }
  func.func @transform_2(%arg0: i32, %arg1: i32) -> (i32, i32) {
    %c0_i32 = arith.constant 0 : i32
    %c0_i32_0 = arith.constant 0 : i32
    %c0_i32_1 = arith.constant 0 : i32
    return %c0_i32, %c0_i32_0 : i32, i32
  }
  func.func @transform_3(%arg0: i32, %arg1: i32) -> (i32, i32, i32) {
    %c0_i32 = arith.constant 0 : i32
    %c0_i32_0 = arith.constant 0 : i32
    return %arg0, %c0_i32, %arg1 : i32, i32, i32
  }
}

</mosaic_0001>

<llo_original>
// kernel: tpu_custom_call.1
$region0: #{tpu_custom_call.1}
  #allocation0 [shape = 'u32[]', space=smem, size = 0x4, offset = 0x4, fixed_abs, tag = 'smem constant byte address 0x4 - core index']
  #allocation1 [shape = 'u32[144,128]{1,0:T(1,128)}', space=vmem, size = 0x12000, scoped, tag = 'internal scratch']
  %s0 = inlined_call_operand.hbm [shape: f32[2,4,256], index: 0, kind: input, shape index: {}]
  %s1 = inlined_call_operand.vmem [shape: f32[4,1], index: 1, kind: input, shape index: {}]
  %s2 = inlined_call_operand.vmem [shape: f32[4,1], index: 2, kind: input, shape index: {}]
  %s3 = inlined_call_operand.hbm [shape: f32[2,4,256], index: 3, kind: output, shape index: {}]
  %s4 = sld [smem:[#allocation0]]
  $region49: #{tpu_custom_call.1} parent=0
    _
  %s6 = ssub.s32 1, %s4
  %s7 = scalar_select 0, %s6, %s4
  $region1: #{tpu_custom_call.1} parent=0
    #allocation2 [shape = 'u8[8192]{0}', space=vmem, size = 0x2000, scoped, tag = 'input window, operand 0']
    #allocation3 [shape = 's32[2]{0}', space=sflag, size = 0x8, scoped, tag = 'scoped memory for tpu_custom_call.1']
    #allocation4 [shape = 's32[2]{0}', space=sflag, size = 0x8, scoped, tag = 'scoped memory for tpu_custom_call.1']
    #allocation5 [shape = 'u8[8192]{0}', space=vmem, size = 0x2000, scoped, tag = 'output window, operand 0']
    %8 = vsyncpa [#allocation3], 0
    %s9 = scalar_lea.sflag [#allocation3], 1
    %10 = vsyncpa %s9, 0
    %11 = vsyncpa [#allocation4], 0
    %s12 = scalar_lea.sflag [#allocation4], 1
    %13 = vsyncpa %s12, 0
    loop: start=0, step=1, limit=4
    $region2: #{tpu_custom_call.1} parent=1 // loop_pre_header
      _
    $region3: #{tpu_custom_call.1} parent=1 // loop_header
      %s15 = sphi 0, %s19
      %p16 = scmp.ge.s32.totalorder %s15, 4
      %s22 = sphi 0, %s34
      %s23 = sphi 0, %s30
      %s24 = sphi 0, %s22
      %s25 = sphi 0, %s23
      %s26 = sphi 0, %s24
      %s27 = sphi 0, %s25
      %s39 = sphi 0, %s41
      %s42 = sphi 0, %s39
      %s43 = sphi 0, %s42
      %s59 = sphi 0, %s43
      %s63 = sphi 0, %s63
      %s65 = sphi 0, %s63
      %s66 = sphi 0, %s65
      %s80 = sphi 0, %s66
      %s84 = sphi 0, %s84
      %s86 = sphi 0, %s84
      %s87 = sphi 0, %s86
      %s101 = sphi 0, %s87
      %s109 = sphi 0, %s111
      %s112 = sphi 0, %s109
      %s113 = sphi 0, %s112
      %s129 = sphi 0, %s113
    $region4: #{tpu_custom_call.1} parent=1 // loop_header_branch
      %18 = sbr.rel (%p16) target = $region8
    $region5: #{tpu_custom_call.1} parent=1 // loop_body
      %s20 = ssub.s32 %s15, 1
      %s21 = ssub.s32 %s15, 2
      %s28 = sadd.s32 1, %s23
      %p29 = scmp.ge.s32.totalorder %s28, 1
      %s30 = scalar_select %p29, 0, %s28
      %s31 = sadd.s32 1, %s22
      %s32 = scalar_select %p29, %s31, %s22
      %p33 = scmp.ge.s32.totalorder %s32, 2
      %s34 = scalar_select %p33, 0, %s32
      %s35 = ssub.s32 %s22, %s34
      %s36 = ssub.s32 %s23, %s30
      %s37 = sor.u32 %s35, %s36
      %p38 = scmp.eq.s32.totalorder %s37, 0
      %s40 = sadd.s32 %s39, 1
      %s41 = scalar_select %p38, %s39, %s40
      %p44 = pneg %p38
      %p45 = scmp.eq.s32.totalorder %s15, 1
      %p46 = por %p44, %p45
      %p47 = scmp.ne.s32.totalorder %s39, %s42
      %p48 = scmp.eq.s32.totalorder %s15, 0
      %p49 = por %p47, %p48
      %p50 = scmp.ne.s32.totalorder %s39, %s42
      %p51 = scmp.eq.s32.totalorder %s20, 1
      %p52 = por %p50, %p51
      %p53 = scmp.ne.s32.totalorder %s42, %s43
      %p54 = scmp.eq.s32.totalorder %s20, 0
      %p55 = por %p53, %p54
      %p56 = scmp.ne.s32.totalorder %s42, %s43
      %p57 = scmp.eq.s32.totalorder %s21, 1
      %p58 = por %p56, %p57
      %p60 = scmp.ne.s32.totalorder %s43, %s59
      %p61 = scmp.eq.s32.totalorder %s21, 0
      %p62 = por %p60, %p61
      %s64 = sadd.s32 %s63, 1
      %p67 = scmp.eq.s32.totalorder %s15, 1
      %p68 = scmp.ne.s32.totalorder %s63, %s65
      %p69 = scmp.eq.s32.totalorder %s15, 0
      %p70 = por %p68, %p69
      %p71 = scmp.ne.s32.totalorder %s63, %s65
      %p72 = scmp.eq.s32.totalorder %s20, 1
      %p73 = por %p71, %p72
      %p74 = scmp.ne.s32.totalorder %s65, %s66
      %p75 = scmp.eq.s32.totalorder %s20, 0
      %p76 = por %p74, %p75
      %p77 = scmp.ne.s32.totalorder %s65, %s66
      %p78 = scmp.eq.s32.totalorder %s21, 1
      %p79 = por %p77, %p78
      %p81 = scmp.ne.s32.totalorder %s66, %s80
      %p82 = scmp.eq.s32.totalorder %s21, 0
      %p83 = por %p81, %p82
      %s85 = sadd.s32 %s84, 1
      %p88 = scmp.eq.s32.totalorder %s15, 1
      %p89 = scmp.ne.s32.totalorder %s84, %s86
      %p90 = scmp.eq.s32.totalorder %s15, 0
      %p91 = por %p89, %p90
      %p92 = scmp.ne.s32.totalorder %s84, %s86
      %p93 = scmp.eq.s32.totalorder %s20, 1
      %p94 = por %p92, %p93
      %p95 = scmp.ne.s32.totalorder %s86, %s87
      %p96 = scmp.eq.s32.totalorder %s20, 0
      %p97 = por %p95, %p96
      %p98 = scmp.ne.s32.totalorder %s86, %s87
      %p99 = scmp.eq.s32.totalorder %s21, 1
      %p100 = por %p98, %p99
      %p102 = scmp.ne.s32.totalorder %s87, %s101
      %p103 = scmp.eq.s32.totalorder %s21, 0
      %p104 = por %p102, %p103
      %s105 = ssub.s32 %s22, %s34
      %s106 = ssub.s32 %s23, %s30
      %s107 = sor.u32 %s105, %s106
      %p108 = scmp.eq.s32.totalorder %s107, 0
      %s110 = sadd.s32 %s109, 1
      %s111 = scalar_select %p108, %s109, %s110
      %p114 = pneg %p108
      %p115 = scmp.eq.s32.totalorder %s15, 1
      %p116 = por %p114, %p115
      %p117 = scmp.ne.s32.totalorder %s109, %s112
      %p118 = scmp.eq.s32.totalorder %s15, 0
      %p119 = por %p117, %p118
      %p120 = scmp.ne.s32.totalorder %s109, %s112
      %p121 = scmp.eq.s32.totalorder %s20, 1
      %p122 = por %p120, %p121
      %p123 = scmp.ne.s32.totalorder %s112, %s113
      %p124 = scmp.eq.s32.totalorder %s20, 0
      %p125 = por %p123, %p124
      %p126 = scmp.ne.s32.totalorder %s112, %s113
      %p127 = scmp.eq.s32.totalorder %s21, 1
      %p128 = por %p126, %p127
      %p130 = scmp.ne.s32.totalorder %s113, %s129
      %p131 = scmp.eq.s32.totalorder %s21, 0
      %p132 = por %p130, %p131
      %p133 = scmp.le.s32.totalorder 1, %s15
      %p134 = scmp.lt.s32.totalorder %s15, 3
      %p135 = pnand %p133, %p134
      %p136 = pneg %p135
      // Predicated region
      $region9: #{tpu_custom_call.1} parent=5 // pred_check
        _
      $region10: #{tpu_custom_call.1} parent=5 // pred_check_branch
        %138 = sbr.rel (%p135) target = $region12
      $region11: #{tpu_custom_call.1} parent=5 // pred_region
        %s139 = ssub.s32 %s15, 1
        // Predicated region
        $region13: #{tpu_custom_call.1} parent=11 // pred_check
          %p140 = pneg %p76
        $region14: #{tpu_custom_call.1} parent=11 // pred_check_branch
          %142 = sbr.rel (%p140) target = $region16
        $region15: #{tpu_custom_call.1} parent=11 // pred_region
          _
        $region16: #{tpu_custom_call.1} parent=11 // pred_fallthru
          _
        // Predicated region
        $region17: #{tpu_custom_call.1} parent=11 // pred_check
          %p143 = pneg %p97
        $region18: #{tpu_custom_call.1} parent=11 // pred_check_branch
          %145 = sbr.rel (%p143) target = $region20
        $region19: #{tpu_custom_call.1} parent=11 // pred_region
          _
        $region20: #{tpu_custom_call.1} parent=11 // pred_fallthru
          _
      $region12: #{tpu_custom_call.1} parent=5 // pred_fallthru
        _
      %p146 = scmp.lt.s32.totalorder %s15, 2
      // Predicated region
      $region21: #{tpu_custom_call.1} parent=5 // pred_check
        %p147 = pneg %p146
      $region22: #{tpu_custom_call.1} parent=5 // pred_check_branch
        %149 = sbr.rel (%p147) target = $region24
      $region23: #{tpu_custom_call.1} parent=5 // pred_region
        // Predicated region
        $region25: #{tpu_custom_call.1} parent=23 // pred_check
          %p150 = pneg %p49
        $region26: #{tpu_custom_call.1} parent=23 // pred_check_branch
          %152 = sbr.rel (%p150) target = $region28
        $region27: #{tpu_custom_call.1} parent=23 // pred_region
          %s153 = sand.u32 %s39, 1
          %s154 = scalar_lea.sflag [#allocation3], %s153
          %s155 = sand.u32 %s39, 1
          %s156 = smul.addr %s155, 8
          %s157 = scalar_lea.vmem [#allocation2], %s156
          %s158 = smul.u32 2, %s23
          %s160 = ssub.s32 128, 128
          %161 = vsyncadd %s154, %s160
          %s162 = smul.addr %s22, 2
          %s163 = sadd.s32 %s158, %s162
          %s164 = smul.addr %s163, 64
          %s165 = scalar_lea.hbm %s0, %s164
          %s167 = sshll.u32 %s157, 4
          %s168 = int_to_ptr.vmem [resolvable:$true] %s167
          %170 = dma.hbm_to_vmem [thread:$0]  %s165, 128, %s168, %s154
        $region28: #{tpu_custom_call.1} parent=23 // pred_fallthru
          _
      $region24: #{tpu_custom_call.1} parent=5 // pred_fallthru
        _
      %p171 = scmp.le.s32.totalorder 1, %s15
      %p172 = scmp.lt.s32.totalorder %s15, 3
      %p173 = pnand %p171, %p172
      %p174 = pneg %p173
      // Predicated region
      $region29: #{tpu_custom_call.1} parent=5 // pred_check
        _
      $region30: #{tpu_custom_call.1} parent=5 // pred_check_branch
        %176 = sbr.rel (%p173) target = $region32
      $region31: #{tpu_custom_call.1} parent=5 // pred_region
        %s177 = ssub.s32 %s15, 1
        %s178 = sand.u32 %s42, 1
        %s179 = scalar_lea.sflag [#allocation3], %s178
        %s180 = sand.u32 %s42, 1
        %s181 = smul.addr %s180, 8
        %s182 = scalar_lea.vmem [#allocation2], %s181
        // Predicated region
        $region33: #{tpu_custom_call.1} parent=31 // pred_check
          %p183 = pneg %p55
        $region34: #{tpu_custom_call.1} parent=31 // pred_check_branch
          %185 = sbr.rel (%p183) target = $region36
        $region35: #{tpu_custom_call.1} parent=31 // pred_region
          %186 = dma.done %s179, 128
        $region36: #{tpu_custom_call.1} parent=31 // pred_fallthru
          _
        %s187 = sand.u32 %s42, 1
        %s188 = scalar_lea.sflag [#allocation3], %s187
        %s189 = sand.u32 %s42, 1
        %s190 = smul.addr %s189, 8
        %s191 = scalar_lea.vmem [#allocation2], %s190
        %p192 = pneg %p55
        %p193 = pneg %p52
        %p194 = pneg %p76
        %p195 = pneg %p73
        %p196 = pneg %p97
        %p197 = pneg %p94
        %p198 = pneg %p125
        %p199 = pneg %p122
        %s200 = sand.u32 %s112, 1
        %s201 = scalar_lea.sflag [#allocation4], %s200
        %s202 = sand.u32 %s112, 1
        %s203 = smul.addr %s202, 8
        %s204 = scalar_lea.vmem [#allocation5], %s203
        %s205 = smul.u32 2, %s25
        %s206 = smul.u32 2, %s25
        %v207 = vld [vmem:[%s182] sm:$0xff]
        %v208 = vld [vmem:[%s1] sm:$0xf]
        %v209 = vld [vmem:[%s2] sm:$0xf]
        %v211 = vcombine.high %v207, %v207
        %vm213 = vcmask 1043456
        %v214 = vsel %vm213, %v207, 0.0
        %v215 = vrot.slane %v214, 4
        %v216 = vadd.f32 %v214, %v215
        %v217 = vrot.slane %v216, 2
        %v218 = vadd.f32 %v216, %v217
        %v219 = vrot.slane %v218, 1
        %v220 = vadd.f32 %v218, %v219
        %v221 = vsel %vm213, %v211, 0.0
        %v222 = vrot.slane %v221, 4
        %v223 = vadd.f32 %v221, %v222
        %v224 = vrot.slane %v223, 2
        %v225 = vadd.f32 %v223, %v224
        %v226 = vrot.slane %v225, 1
        %v227 = vadd.f32 %v225, %v226
        %v228 = vmul.f32 %v220, 0.25
        %v229 = vmul.f32 %v227, 0.25
        %v232 = vcombine.low %v228, %v229
        %v234 = vsub.f32 %v207, %v232
        %v235 = vmul.f32 %v234, %v234
        %v237 = vcombine.high %v235, %v235
        %v239 = vsel %vm213, %v235, 0.0
        %v240 = vrot.slane %v239, 4
        %v241 = vadd.f32 %v239, %v240
        %v242 = vrot.slane %v241, 2
        %v243 = vadd.f32 %v241, %v242
        %v244 = vrot.slane %v243, 1
        %v245 = vadd.f32 %v243, %v244
        %v246 = vsel %vm213, %v237, 0.0
        %v247 = vrot.slane %v246, 4
        %v248 = vadd.f32 %v246, %v247
        %v249 = vrot.slane %v248, 2
        %v250 = vadd.f32 %v248, %v249
        %v251 = vrot.slane %v250, 1
        %v252 = vadd.f32 %v250, %v251
        %v253 = vmul.f32 %v245, 0.25
        %v254 = vmul.f32 %v252, 0.25
        %v255 = vadd.f32 %v253, 1e-06
        %v256 = vadd.f32 %v254, 1e-06
        %v257 = vrsqrt.pop %v255
        %v258 = vrsqrt.pop %v256
        %v261 = vcombine.low %v257, %v258
        %v263 = vmul.f32 %v234, %v261
        %265 = vset.pattern.permute.xlu0 0
        %266 = vperm.xlu0 %265, %v208
        %v267 = vpop.permute.xlu0 %266
        %v269 = vunpack.c.l.s4 839922192
        %v270 = vunpack.c.0.s8 %v269
        %v271 = vlaneseq
        %v272 = vshrl.u32 %v271, 7
        %v273 = vsub.s32 %v270, %v272
        %v274 = vrot.slane %v267, %v273
        %v276 = vmul.f32 %v263, %v274
        %278 = vset.pattern.permute.xlu0 0
        %279 = vperm.xlu0 %278, %v209
        %v280 = vpop.permute.xlu0 %279
        %v282 = vunpack.c.l.s4 839922192
        %v283 = vunpack.c.0.s8 %v282
        %v284 = vlaneseq
        %v285 = vshrl.u32 %v284, 7
        %v286 = vsub.s32 %v283, %v285
        %v287 = vrot.slane %v280, %v286
        %v289 = vadd.f32 %v276, %v287
        %290 = vst [vmem:[%s204] sm:$0xff] %v289
        %s291 = sand.u32 %s112, 1
        %s292 = scalar_lea.sflag [#allocation4], %s291
        %s293 = sand.u32 %s112, 1
        %s294 = smul.addr %s293, 8
        %s295 = scalar_lea.vmem [#allocation5], %s294
        // Predicated region
        $region37: #{tpu_custom_call.1} parent=31 // pred_check
          %p296 = pneg %p122
        $region38: #{tpu_custom_call.1} parent=31 // pred_check_branch
          %298 = sbr.rel (%p296) target = $region40
        $region39: #{tpu_custom_call.1} parent=31 // pred_region
          %s299 = smul.u32 2, %s25
          %s301 = ssub.s32 128, 128
          %302 = vsyncadd %s292, %s301
          %s303 = smul.addr %s24, 2
          %s304 = sadd.s32 %s299, %s303
          %s305 = smul.addr %s304, 64
          %s306 = scalar_lea.hbm %s3, %s305
          %s308 = sshll.u32 %s295, 4
          %s309 = int_to_ptr.vmem [resolvable:$true] %s308
          %311 = dma.vmem_to_hbm [thread:$0]  %s309, 128, %s306, %s292
        $region40: #{tpu_custom_call.1} parent=31 // pred_fallthru
          _
      $region32: #{tpu_custom_call.1} parent=5 // pred_fallthru
        _
      %p312 = scmp.le.s32.totalorder 2, %s15
      // Predicated region
      $region41: #{tpu_custom_call.1} parent=5 // pred_check
        %p313 = pneg %p312
      $region42: #{tpu_custom_call.1} parent=5 // pred_check_branch
        %315 = sbr.rel (%p313) target = $region44
      $region43: #{tpu_custom_call.1} parent=5 // pred_region
        %s316 = ssub.s32 %s15, 2
        // Predicated region
        $region45: #{tpu_custom_call.1} parent=43 // pred_check
          %p317 = pneg %p128
        $region46: #{tpu_custom_call.1} parent=43 // pred_check_branch
          %319 = sbr.rel (%p317) target = $region48
        $region47: #{tpu_custom_call.1} parent=43 // pred_region
          %s320 = sand.u32 %s113, 1
          %s321 = scalar_lea.sflag [#allocation4], %s320
          %s322 = sand.u32 %s113, 1
          %s323 = smul.addr %s322, 8
          %s324 = scalar_lea.vmem [#allocation5], %s323
          %325 = dma.done %s321, 128
        $region48: #{tpu_custom_call.1} parent=43 // pred_fallthru
          _
      $region44: #{tpu_custom_call.1} parent=5 // pred_fallthru
        _
    $region6: #{tpu_custom_call.1} parent=1 // loop_footer
      %s19 = sadd.s32 1, %s15
    $region7: #{tpu_custom_call.1} parent=1 // loop_footer_branch
      %14 = sbr.rel target = $region3
    $region8: #{tpu_custom_call.1} parent=1 // loop_exit
      _
    %326 = vsyncpa [#allocation3], 1
    %s327 = scalar_lea.sflag [#allocation3], 1
    %328 = vsyncpa %s327, 1
    %329 = vsyncpa [#allocation4], 1
    %s330 = scalar_lea.sflag [#allocation4], 1
    %331 = vsyncpa %s330, 1

</llo_original>
